<compile_context>
chip_gen: v5e
topology: v5e:2x2
jax: 0.10.0
libtpu: 0.0.40
codegen_flags: <defaults>
</compile_context>

<pallas_src>
import functools

import jax
import jax.numpy as jnp
from jax.experimental import pallas as pl
from jax.experimental.pallas import tpu as pltpu

LN_EPS = 1e-5
K_TILE = 512          # contraction tile when input_dim is large (multiple of 128)
MAX_BATCH_TILE = 512  # mem-bound sweet spot per measured tiling data


def _round_up(x, m):
    return ((x + m - 1) // m) * m


def _pick_batch_tile(batch):
    """Batch tile: multiple of 8, >=2 grid steps when batch >= 16 (v7x megacore)."""
    b8 = _round_up(batch, 8)
    if b8 < 16:
        return b8
    half = max(8, (b8 // 2 // 8) * 8)   # floor(b8/2) rounded down to multiple of 8
    return min(MAX_BATCH_TILE, half)


# ----------------------------------------------------------------------------
# Fused kernel: (Linear over K tiles) -> LayerNorm -> ReLU on a [tm, *] tile.
# ----------------------------------------------------------------------------
def _projector_kernel(x_ref, w_ref, b_ref, g_ref, beta_ref, o_ref, acc_ref,
                      *, out_features):
    k = pl.program_id(1)

    @pl.when(k == 0)
    def _():
        acc_ref[...] = jnp.zeros_like(acc_ref)

    # bf16 inputs into the MXU, f32 accumulate.
    x = x_ref[...].astype(jnp.bfloat16)
    acc_ref[...] += jnp.dot(x, w_ref[...], preferred_element_type=jnp.float32)

    @pl.when(k == pl.num_programs(1) - 1)
    def _():
        h = acc_ref[...] + b_ref[...]                       # [tm, OUT_pad], f32
        # One-pass LayerNorm statistics over the real feature count; padded
        # lanes are exactly zero (zero-padded W/b) so they don't perturb sums.
        inv_n = jnp.float32(1.0 / out_features)
        s = jnp.sum(h, axis=-1, keepdims=True)
        s2 = jnp.sum(h * h, axis=-1, keepdims=True)
        mu = s * inv_n
        var = jnp.maximum(s2 * inv_n - mu * mu, 0.0)        # guard cancellation
        y = (h - mu) * jax.lax.rsqrt(var + LN_EPS) * g_ref[...] + beta_ref[...]
        o_ref[...] = jnp.maximum(y, 0.0).astype(o_ref.dtype)


# ----------------------------------------------------------------------------
# Wrapper: padding, tiling, pallas_call.
# ----------------------------------------------------------------------------
def modality_projector(x, params):
    """x: [B, input_dim] float32 -> [B, output_dim] float32."""
    B, IN = x.shape
    w = params["w"]                    # [IN, OUT], bfloat16
    OUT = w.shape[1]

    # --- pad feature dims -----------------------------------------------------
    OUT_pad = _round_up(OUT, 128)                       # lane-dense stores
    if IN <= K_TILE:
        tk, IN_pad = IN, IN                             # single K step, full dim
    else:
        tk, IN_pad = K_TILE, _round_up(IN, K_TILE)      # K-tiled contraction

    tm = _pick_batch_tile(B)
    B_pad = _round_up(B, tm)

    if (B_pad, IN_pad) != (B, IN):
        x = jnp.pad(x, ((0, B_pad - B), (0, IN_pad - IN)))
    if (IN_pad, OUT_pad) != (IN, OUT):
        w = jnp.pad(w, ((0, IN_pad - IN), (0, OUT_pad - OUT)))
    b, g, beta = params["b"], params["ln_g"], params["ln_b"]
    if OUT_pad != OUT:
        pad = ((0, 0), (0, OUT_pad - OUT))
        b, g, beta = jnp.pad(b, pad), jnp.pad(g, pad), jnp.pad(beta, pad)

    n_b, n_k = B_pad // tm, IN_pad // tk
    grid = (n_b, n_k)

    # Broadcast operands (constant index_map) only need one buffer.
    bcast_mode = pl.Buffered(1)
    w_mode = pl.Buffered(1) if n_k == 1 else None       # K-varying W keeps default 2

    kernel = functools.partial(_projector_kernel, out_features=OUT)

    cost = pl.CostEstimate(
        flops=2 * B_pad * IN_pad * OUT_pad,
        transcendentals=0,
        bytes_accessed=(B_pad * IN_pad * 4            # x (f32)
                        + IN_pad * OUT_pad * 2        # W (bf16)
                        + 3 * OUT_pad * 4             # b, gamma, beta
                        + B_pad * OUT_pad * 4),       # output (f32)
    )

    out = pl.pallas_call(
        kernel,
        out_shape=jax.ShapeDtypeStruct((B_pad, OUT_pad), jnp.float32),
        grid=grid,
        in_specs=[
            pl.BlockSpec((tm, tk), lambda i, k: (i, k)),                            # x tile
            pl.BlockSpec((tk, OUT_pad), lambda i, k: (k, 0), pipeline_mode=w_mode), # W tile
            pl.BlockSpec((1, OUT_pad), lambda i, k: (0, 0), pipeline_mode=bcast_mode),  # bias
            pl.BlockSpec((1, OUT_pad), lambda i, k: (0, 0), pipeline_mode=bcast_mode),  # LN gamma
            pl.BlockSpec((1, OUT_pad), lambda i, k: (0, 0), pipeline_mode=bcast_mode),  # LN beta
        ],
        out_specs=pl.BlockSpec((tm, OUT_pad), lambda i, k: (i, 0)),
        scratch_shapes=[pltpu.VMEM((tm, OUT_pad), jnp.float32)],   # f32 accumulator
        compiler_params=pltpu.CompilerParams(
            dimension_semantics=("parallel", "arbitrary"),         # batch || , K reduce
            vmem_limit_bytes=64 * 1024 * 1024,
        ),
        cost_estimate=cost,
    )(x, w, b, g, beta)

    return out[:B, :OUT]


# ----------------------------------------------------------------------------
# Pure-JAX reference (mirrors torch: Linear -> LayerNorm -> ReLU), f32 math.
# ----------------------------------------------------------------------------
def reference_forward(x, params):
    w = params["w"].astype(jnp.float32)
    h = jnp.dot(x, w, precision=jax.lax.Precision.HIGHEST) + params["b"]
    mu = jnp.mean(h, axis=-1, keepdims=True)
    var = jnp.mean((h - mu) ** 2, axis=-1, keepdims=True)
    y = (h - mu) / jnp.sqrt(var + LN_EPS) * params["ln_g"] + params["ln_b"]
    return jnp.maximum(y, 0.0)


# ----------------------------------------------------------------------------
# Deterministic parameter init (Linear weight bf16; LayerNorm affine ~ identity).
# ----------------------------------------------------------------------------
def init_params(key, input_dim, output_dim):
    k_w, k_b, k_g, k_beta = jax.random.split(key, 4)
    w = 0.1 * jax.random.normal(k_w, (input_dim, output_dim), jnp.float32)
    return {
        "w": w.astype(jnp.bfloat16),     # bf16-native MXU path, half the DMA bytes
        "b": 0.1 * jax.random.normal(k_b, (1, output_dim), jnp.float32),
        "ln_g": 1.0 + 0.1 * jax.random.normal(k_g, (1, output_dim), jnp.float32),
        "ln_b": 0.1 * jax.random.normal(k_beta, (1, output_dim), jnp.float32),
    }


if __name__ == "__main__":
    B, IN, OUT = 8, 64, 128   # batch=8, input_dim=64, output_dim=128
    key = jax.random.PRNGKey(0)
    pkey, xkey = jax.random.split(key)
    params = init_params(pkey, IN, OUT)
    x = jax.random.normal(xkey, (B, IN), jnp.float32)

    out = jax.block_until_ready(modality_projector(x, params))
    ref = reference_forward(x, params)

    assert out.shape == (B, OUT)
    assert jnp.allclose(out, ref, atol=2e-2, rtol=2e-2), "projector output mismatch"
    print("KERNEL_OK")
</pallas_src>

<mosaic_0001>
module attributes {stable_mosaic.version = 11 : i64} {
  func.func @_projector_kernel(%arg0: i32, %arg1: i32, %arg2: memref<8x64xf32, #tpu.memory_space<vmem>>, %arg3: memref<64x128xbf16, #tpu.memory_space<vmem>>, %arg4: memref<1x128xf32, #tpu.memory_space<vmem>>, %arg5: memref<1x128xf32, #tpu.memory_space<vmem>>, %arg6: memref<1x128xf32, #tpu.memory_space<vmem>>, %arg7: memref<8x128xf32, #tpu.memory_space<vmem>>, %arg8: memref<8x128xf32, #tpu.memory_space<vmem>>) attributes {dimension_semantics = [#tpu.dimension_semantics<parallel>, #tpu.dimension_semantics<arbitrary>], iteration_bounds = array<i64: 1, 1>, scalar_prefetch = 0 : i64, scratch_operands = 1 : i64, tpu.core_type = #tpu.core_type<tc>, window_params = [{transform_indices = @transform_0, window_bounds = array<i64: 8, 64>}, {pipeline_mode = #tpu.pipeline_mode<synchronous>, transform_indices = @transform_1, window_bounds = array<i64: 64, 128>}, {pipeline_mode = #tpu.pipeline_mode<synchronous>, transform_indices = @transform_2, window_bounds = array<i64: 1, 128>}, {pipeline_mode = #tpu.pipeline_mode<synchronous>, transform_indices = @transform_3, window_bounds = array<i64: 1, 128>}, {pipeline_mode = #tpu.pipeline_mode<synchronous>, transform_indices = @transform_4, window_bounds = array<i64: 1, 128>}, {transform_indices = @transform_5, window_bounds = array<i64: 8, 128>}]} {
    %c0_i32 = arith.constant 0 : i32
    %0 = arith.cmpi eq, %arg1, %c0_i32 : i32
    %1 = arith.extui %0 : i1 to i32
    %c0_i32_0 = arith.constant 0 : i32
    %2 = arith.cmpi ne, %1, %c0_i32_0 : i32
    scf.if %2 {
      %cst_10 = arith.constant 0.000000e+00 : f32
      %13 = vector.broadcast %cst_10 : f32 to vector<8x128xf32>
      %c0_11 = arith.constant 0 : index
      %c0_12 = arith.constant 0 : index
      %14 = vector.load %arg8[%c0_11, %c0_12] : memref<8x128xf32, #tpu.memory_space<vmem>>, vector<8x128xf32>
      tpu.vector_store %arg8[%c0_11, %c0_12], %13 {strides = array<i32>} : memref<8x128xf32, #tpu.memory_space<vmem>>, vector<8x128xf32>,
    } else {
    }
    %c0 = arith.constant 0 : index
    %c0_1 = arith.constant 0 : index
    %3 = vector.load %arg2[%c0, %c0_1] : memref<8x64xf32, #tpu.memory_space<vmem>>, vector<8x64xf32>
    %4 = arith.truncf %3 : vector<8x64xf32> to vector<8x64xbf16>
    %c0_2 = arith.constant 0 : index
    %c0_3 = arith.constant 0 : index
    %5 = vector.load %arg8[%c0_2, %c0_3] : memref<8x128xf32, #tpu.memory_space<vmem>>, vector<8x128xf32>
    %c0_4 = arith.constant 0 : index
    %c0_5 = arith.constant 0 : index
    %6 = vector.load %arg3[%c0_4, %c0_5] : memref<64x128xbf16, #tpu.memory_space<vmem>>, vector<64x128xbf16>
    %cst = arith.constant dense<0.000000e+00> : vector<8x128xf32>
    %7 = tpu.matmul %4, %6, %cst {dimension_numbers = #tpu.dot_dimension_numbers<[1], [0], [0], [1], [0, 0, 1, 1], [], []>} : vector<8x64xbf16>, vector<64x128xbf16>, vector<8x128xf32> -> vector<8x128xf32>
    %8 = arith.addf %5, %7 : vector<8x128xf32>
    %c0_6 = arith.constant 0 : index
    %c0_7 = arith.constant 0 : index
    %9 = vector.load %arg8[%c0_6, %c0_7] : memref<8x128xf32, #tpu.memory_space<vmem>>, vector<8x128xf32>
    tpu.vector_store %arg8[%c0_6, %c0_7], %8 {strides = array<i32>} : memref<8x128xf32, #tpu.memory_space<vmem>>, vector<8x128xf32>,
    %c0_i32_8 = arith.constant 0 : i32
    %10 = arith.cmpi eq, %arg1, %c0_i32_8 : i32
    %11 = arith.extui %10 : i1 to i32
    %c0_i32_9 = arith.constant 0 : i32
    %12 = arith.cmpi ne, %11, %c0_i32_9 : i32
    scf.if %12 {
      %c0_10 = arith.constant 0 : index
      %c0_11 = arith.constant 0 : index
      %13 = vector.load %arg8[%c0_10, %c0_11] : memref<8x128xf32, #tpu.memory_space<vmem>>, vector<8x128xf32>
      %c0_12 = arith.constant 0 : index
      %c0_13 = arith.constant 0 : index
      %14 = vector.load %arg4[%c0_12, %c0_13] : memref<1x128xf32, #tpu.memory_space<vmem>>, vector<1x128xf32>
      %15 = vector.broadcast %14 : vector<1x128xf32> to vector<8x128xf32>
      %16 = arith.addf %13, %15 : vector<8x128xf32>
      %cst_14 = arith.constant dense<0.000000e+00> : vector<8xf32>
      %17 = vector.multi_reduction <add>, %16, %cst_14 [1] : vector<8x128xf32> to vector<8xf32>
      %18 = vector.shape_cast %17 : vector<8xf32> to vector<8x1xf32>
      %19 = arith.mulf %16, %16 : vector<8x128xf32>
      %cst_15 = arith.constant dense<0.000000e+00> : vector<8xf32>
      %20 = vector.multi_reduction <add>, %19, %cst_15 [1] : vector<8x128xf32> to vector<8xf32>
      %21 = vector.shape_cast %20 : vector<8xf32> to vector<8x1xf32>
      %cst_16 = arith.constant 7.812500e-03 : f32
      %22 = vector.broadcast %cst_16 : f32 to vector<8x1xf32>
      %23 = arith.mulf %18, %22 : vector<8x1xf32>
      %cst_17 = arith.constant 7.812500e-03 : f32
      %24 = vector.broadcast %cst_17 : f32 to vector<8x1xf32>
      %25 = arith.mulf %21, %24 : vector<8x1xf32>
      %26 = arith.mulf %23, %23 : vector<8x1xf32>
      %27 = arith.subf %25, %26 : vector<8x1xf32>
      %cst_18 = arith.constant 0.000000e+00 : f32
      %28 = vector.broadcast %cst_18 : f32 to vector<8x1xf32>
      %29 = arith.maximumf %27, %28 : vector<8x1xf32>
      %30 = vector.broadcast %23 : vector<8x1xf32> to vector<8x128xf32>
      %31 = arith.subf %16, %30 : vector<8x128xf32>
      %cst_19 = arith.constant 9.99999974E-6 : f32
      %32 = vector.broadcast %cst_19 : f32 to vector<8x1xf32>
      %33 = arith.addf %29, %32 : vector<8x1xf32>
      %34 = math.rsqrt %33 : vector<8x1xf32>
      %35 = vector.broadcast %34 : vector<8x1xf32> to vector<8x128xf32>
      %36 = arith.mulf %31, %35 : vector<8x128xf32>
      %c0_20 = arith.constant 0 : index
      %c0_21 = arith.constant 0 : index
      %37 = vector.load %arg5[%c0_20, %c0_21] : memref<1x128xf32, #tpu.memory_space<vmem>>, vector<1x128xf32>
      %38 = vector.broadcast %37 : vector<1x128xf32> to vector<8x128xf32>
      %39 = arith.mulf %36, %38 : vector<8x128xf32>
      %c0_22 = arith.constant 0 : index
      %c0_23 = arith.constant 0 : index
      %40 = vector.load %arg6[%c0_22, %c0_23] : memref<1x128xf32, #tpu.memory_space<vmem>>, vector<1x128xf32>
      %41 = vector.broadcast %40 : vector<1x128xf32> to vector<8x128xf32>
      %42 = arith.addf %39, %41 : vector<8x128xf32>
      %cst_24 = arith.constant 0.000000e+00 : f32
      %43 = vector.broadcast %cst_24 : f32 to vector<8x128xf32>
      %44 = arith.maximumf %42, %43 : vector<8x128xf32>
      %c0_25 = arith.constant 0 : index
      %c0_26 = arith.constant 0 : index
      %45 = vector.load %arg7[%c0_25, %c0_26] : memref<8x128xf32, #tpu.memory_space<vmem>>, vector<8x128xf32>
      tpu.vector_store %arg7[%c0_25, %c0_26], %44 {strides = array<i32>} : memref<8x128xf32, #tpu.memory_space<vmem>>, vector<8x128xf32>,
    } else {
    }
    return
  }
  func.func @transform_0(%arg0: i32, %arg1: i32) -> (i32, i32) {
    %c0_i32 = arith.constant 0 : i32
    return %arg0, %arg1 : i32, i32
  }
  func.func @transform_1(%arg0: i32, %arg1: i32) -> (i32, i32) {
    %c0_i32 = arith.constant 0 : i32
    %c0_i32_0 = arith.constant 0 : i32
    return %arg1, %c0_i32 : i32, i32
  }
  func.func @transform_2(%arg0: i32, %arg1: i32) -> (i32, i32) {
    %c0_i32 = arith.constant 0 : i32
    %c0_i32_0 = arith.constant 0 : i32
    %c0_i32_1 = arith.constant 0 : i32
    return %c0_i32, %c0_i32_0 : i32, i32
  }
  func.func @transform_3(%arg0: i32, %arg1: i32) -> (i32, i32) {
    %c0_i32 = arith.constant 0 : i32
    %c0_i32_0 = arith.constant 0 : i32
    %c0_i32_1 = arith.constant 0 : i32
    return %c0_i32, %c0_i32_0 : i32, i32
  }
  func.func @transform_4(%arg0: i32, %arg1: i32) -> (i32, i32) {
    %c0_i32 = arith.constant 0 : i32
    %c0_i32_0 = arith.constant 0 : i32
    %c0_i32_1 = arith.constant 0 : i32
    return %c0_i32, %c0_i32_0 : i32, i32
  }
  func.func @transform_5(%arg0: i32, %arg1: i32) -> (i32, i32) {
    %c0_i32 = arith.constant 0 : i32
    %c0_i32_0 = arith.constant 0 : i32
    return %arg0, %c0_i32 : i32, i32
  }
}

</mosaic_0001>

<llo_original>
// kernel: tpu_custom_call.1
$region0: #{tpu_custom_call.1}
  #allocation0 [shape = 'u32[]', space=smem, size = 0x4, offset = 0x4, fixed_abs, tag = 'smem constant byte address 0x4 - core index']
  #allocation1 [shape = 'u32[72,128]{1,0:T(1,128)}', space=vmem, size = 0x9000, scoped, tag = 'internal scratch']
  #allocation2 [shape = 'f32[8,128]{1,0:T(8,128)}', space=vmem, size = 0x1000, scoped, tag = 'scratch operand']
  %s0 = inlined_call_operand.hbm [shape: f32[8,64], index: 0, kind: input, shape index: {}]
  %s1 = inlined_call_operand.hbm [shape: bf16[64,128], index: 1, kind: input, shape index: {}]
  %s2 = inlined_call_operand.vmem [shape: f32[1,128], index: 2, kind: input, shape index: {}]
  %s3 = inlined_call_operand.vmem [shape: f32[1,128], index: 3, kind: input, shape index: {}]
  %s4 = inlined_call_operand.vmem [shape: f32[1,128], index: 4, kind: input, shape index: {}]
  %s5 = inlined_call_operand.hbm [shape: f32[8,128], index: 5, kind: output, shape index: {}]
  %s6 = sld [smem:[#allocation0]]
  $region46: #{tpu_custom_call.1} parent=0
    _
  %s8 = ssub.s32 1, %s6
  %s9 = scalar_select 0, %s8, %s6
  $region1: #{tpu_custom_call.1} parent=0
    #allocation3 [shape = 'u8[4096]{0}', space=vmem, size = 0x1000, scoped, tag = 'input window, operand 0, single buffered']
    #allocation4 [shape = 's32[1]{0}', space=sflag, size = 0x4, scoped, tag = 'scoped memory for tpu_custom_call.1']
    #allocation5 [shape = 's32[1]{0}', space=sflag, size = 0x4, scoped, tag = 'scoped memory for tpu_custom_call.1']
    #allocation6 [shape = 'u8[16384]{0}', space=vmem, size = 0x4000, scoped, tag = 'input window, operand 1, single buffered']
    #allocation7 [shape = 's32[1]{0}', space=sflag, size = 0x4, scoped, tag = 'scoped memory for tpu_custom_call.1']
    #allocation8 [shape = 'u8[4096]{0}', space=vmem, size = 0x1000, scoped, tag = 'output window, operand 0, single buffered']
    %10 = vsyncpa [#allocation4], 0
    %11 = vsyncpa [#allocation7], 0
    %12 = vsyncpa [#allocation5], 0
    // Predicated region
    $region2: #{tpu_custom_call.1} parent=1 // pred_check
      _
    $region3: #{tpu_custom_call.1} parent=1 // pred_check_branch
      %14 = sbr.rel (0) target = $region5
    $region4: #{tpu_custom_call.1} parent=1 // pred_region
      %16 = vsyncadd [#allocation4], 0
      %s18 = sshll.u32 %s0, 4
      %s19 = int_to_ptr.hbm [resolvable:$true] %s18
      %s20 = sshll.u32 [#allocation3], 4
      %s21 = int_to_ptr.vmem [resolvable:$true] %s20
      %23 = dma.hbm_to_vmem [thread:$0]  %s19, 128, %s21, [#allocation4]
    $region5: #{tpu_custom_call.1} parent=1 // pred_fallthru
      _
    // Predicated region
    $region6: #{tpu_custom_call.1} parent=1 // pred_check
      _
    $region7: #{tpu_custom_call.1} parent=1 // pred_check_branch
      %25 = sbr.rel (0) target = $region9
    $region8: #{tpu_custom_call.1} parent=1 // pred_region
      %27 = vsyncadd [#allocation7], 0
      %s28 = sshll.u32 %s1, 4
      %s29 = int_to_ptr.hbm [resolvable:$true] %s28
      %s30 = sshll.u32 [#allocation6], 4
      %s31 = int_to_ptr.vmem [resolvable:$true] %s30
      %36 = dma.hbm_to_vmem [thread:$0]  %s29, 512, %s31, [#allocation7], 64, 64, 4
    $region9: #{tpu_custom_call.1} parent=1 // pred_fallthru
      _
    // Predicated region
    $region10: #{tpu_custom_call.1} parent=1 // pred_check
      _
    $region11: #{tpu_custom_call.1} parent=1 // pred_check_branch
      %38 = sbr.rel (0) target = $region13
    $region12: #{tpu_custom_call.1} parent=1 // pred_region
      _
    $region13: #{tpu_custom_call.1} parent=1 // pred_fallthru
      _
    // Predicated region
    $region14: #{tpu_custom_call.1} parent=1 // pred_check
      _
    $region15: #{tpu_custom_call.1} parent=1 // pred_check_branch
      %40 = sbr.rel (0) target = $region17
    $region16: #{tpu_custom_call.1} parent=1 // pred_region
      _
    $region17: #{tpu_custom_call.1} parent=1 // pred_fallthru
      _
    // Predicated region
    $region18: #{tpu_custom_call.1} parent=1 // pred_check
      _
    $region19: #{tpu_custom_call.1} parent=1 // pred_check_branch
      %42 = sbr.rel (0) target = $region21
    $region20: #{tpu_custom_call.1} parent=1 // pred_region
      _
    $region21: #{tpu_custom_call.1} parent=1 // pred_fallthru
      _
    // Predicated region
    $region22: #{tpu_custom_call.1} parent=1 // pred_check
      _
    $region23: #{tpu_custom_call.1} parent=1 // pred_check_branch
      %44 = sbr.rel (0) target = $region25
    $region24: #{tpu_custom_call.1} parent=1 // pred_region
      %46 = dma.done [#allocation4], 128
    $region25: #{tpu_custom_call.1} parent=1 // pred_fallthru
      _
    // Predicated region
    $region26: #{tpu_custom_call.1} parent=1 // pred_check
      _
    $region27: #{tpu_custom_call.1} parent=1 // pred_check_branch
      %48 = sbr.rel (0) target = $region29
    $region28: #{tpu_custom_call.1} parent=1 // pred_region
      %50 = dma.done [#allocation7], 512
    $region29: #{tpu_custom_call.1} parent=1 // pred_fallthru
      _
    %p52 = scmp.eq.s32.totalorder 0, 0
    // Predicated region
    $region30: #{tpu_custom_call.1} parent=1 // pred_check
      %p53 = pneg %p52
    $region31: #{tpu_custom_call.1} parent=1 // pred_check_branch
      %55 = sbr.rel (%p53) target = $region33
    $region32: #{tpu_custom_call.1} parent=1 // pred_region
      %56 = vst [vmem:[#allocation2] sm:$0xff] 0.0
    $region33: #{tpu_custom_call.1} parent=1 // pred_fallthru
      _
    %v57 = vld [vmem:[#allocation3] sm:$0xff]
    %v58 = vpack.c.bf16 %v57, %v57
    %v59 = vld [vmem:[#allocation2] sm:$0xff]
    %v60 = vld [vmem:[#allocation6] sm:$0xf]
    %v61 = vld [vmem:[#allocation6 + $0x4] sm:$0xf]
    %v62 = vld [vmem:[#allocation6 + $0x8] sm:$0xf]
    %v63 = vld [vmem:[#allocation6 + $0xc] sm:$0xf]
    %v64 = vld [vmem:[#allocation6 + $0x10] sm:$0xf]
    %v65 = vld [vmem:[#allocation6 + $0x14] sm:$0xf]
    %v66 = vld [vmem:[#allocation6 + $0x18] sm:$0xf]
    %v67 = vld [vmem:[#allocation6 + $0x1c] sm:$0xf]
    %v76 = vunpack.c.l.b16 %v60
    %v77 = vunpack.c.l.b16 %v61
    %v78 = vunpack.c.l.b16 %v62
    %v79 = vunpack.c.l.b16 %v63
    %v80 = vunpack.c.l.b16 %v64
    %v81 = vunpack.c.l.b16 %v65
    %v82 = vunpack.c.l.b16 %v66
    %v83 = vunpack.c.l.b16 %v67
    %v84 = vpack.c.b16 %v77, %v76
    %v85 = vpack.c.b16 %v79, %v78
    %v86 = vpack.c.b16 %v81, %v80
    %v87 = vpack.c.b16 %v83, %v82
    %vm92 = vcmask 523264
    %v94 = vsel %vm92, %v58, 0
    %96 = vmatpush.bf16.msra.mxu0 0
    %97 = vmatpush.bf16.msra.mxu0 0
    %98 = vmatpush.bf16.msra.mxu0 0
    %99 = vmatpush.bf16.msra.mxu0 0
    %100 = vmatpush.bf16.msra.mxu0 %v87
    %101 = vmatpush.bf16.msra.mxu0 %v86
    %102 = vmatpush.bf16.msra.mxu0 %v85
    %103 = vmatpush.bf16.msra.mxu0 %v84
    %104 = vmatmul.bf16.gmra.mxu0 %v94
    %v105 = vpop.f32.mrf.mxu0
    %v106 = vadd.f32 0.0, %v105
    %v107 = vpop.f32.mrf.mxu0
    %108 = vdwg.mxu0
    %v109 = vadd.f32 %v59, %v106
    %110 = vst [vmem:[#allocation2] sm:$0xff] %v109
    // Predicated region
    $region34: #{tpu_custom_call.1} parent=1 // pred_check
      %p111 = pneg %p52
    $region35: #{tpu_custom_call.1} parent=1 // pred_check_branch
      %113 = sbr.rel (%p111) target = $region37
    $region36: #{tpu_custom_call.1} parent=1 // pred_region
      %v114 = vld [vmem:[#allocation2] sm:$0xff]
      %v115 = vld [vmem:[%s2] sm:$0x1]
      %v117 = vperm.slane %v115, 0
      %v119 = vadd.f32 %v114, %v117
      %120 = vadd.xlane.f32.xlu0 %v119
      %v121 = vpop.xlane.xlu0 %120
      %v122 = vmul.f32 %v119, %v119
      %123 = vadd.xlane.f32.xlu0 %v122
      %v124 = vpop.xlane.xlu0 %123
      %v125 = vmul.f32 %v121, 0.0078125
      %v126 = vmul.f32 %v124, 0.0078125
      %v127 = vmul.f32 %v125, %v125
      %v128 = vsub.f32 %v126, %v127
      %v129 = vmax.f32 %v128, 0.0
      %v130 = vsub.f32 %v119, %v125
      %v131 = vadd.f32 %v129, 1e-05
      %v132 = vrsqrt.pop %v131
      %v133 = vmul.f32 %v132, %v131
      %v134 = vmul.f32 %v133, %v132
      %v135 = vmul.f32 0.5, %v134
      %v136 = vsub.f32 1.5, %v135
      %v137 = vmul.f32 %v132, %v136
      %vm138 = vweird.f32 %v131
      %vm139 = vweird.f32 %v132
      %vm140 = vmor %vm138, %vm139
      %v141 = vsel %vm140, %v132, %v137
      %v142 = vmul.f32 %v130, %v141
      %v143 = vld [vmem:[%s3] sm:$0x1]
      %v145 = vperm.slane %v143, 0
      %v147 = vmul.f32 %v142, %v145
      %v148 = vld [vmem:[%s4] sm:$0x1]
      %v150 = vperm.slane %v148, 0
      %v152 = vadd.f32 %v147, %v150
      %v153 = vmax.f32 %v152, 0.0
      %154 = vst [vmem:[#allocation8] sm:$0xff] %v153
    $region37: #{tpu_custom_call.1} parent=1 // pred_fallthru
      _
    // Predicated region
    $region38: #{tpu_custom_call.1} parent=1 // pred_check
      _
    $region39: #{tpu_custom_call.1} parent=1 // pred_check_branch
      %156 = sbr.rel (0) target = $region41
    $region40: #{tpu_custom_call.1} parent=1 // pred_region
      %158 = vsyncadd [#allocation5], 0
      %s160 = sshll.u32 [#allocation8], 4
      %s161 = int_to_ptr.vmem [resolvable:$true] %s160
      %s162 = sshll.u32 %s5, 4
      %s163 = int_to_ptr.hbm [resolvable:$true] %s162
      %165 = dma.vmem_to_hbm [thread:$0]  %s161, 128, %s163, [#allocation5]
    $region41: #{tpu_custom_call.1} parent=1 // pred_fallthru
      _
    // Predicated region
    $region42: #{tpu_custom_call.1} parent=1 // pred_check
      _
    $region43: #{tpu_custom_call.1} parent=1 // pred_check_branch
      %167 = sbr.rel (0) target = $region45
    $region44: #{tpu_custom_call.1} parent=1 // pred_region
      %169 = dma.done [#allocation5], 128
    $region45: #{tpu_custom_call.1} parent=1 // pred_fallthru
      _
    %170 = vsyncpa [#allocation4], 1
    %171 = vsyncpa [#allocation7], 1
    %172 = vsyncpa [#allocation5], 1

</llo_original>
